<compile_context>
chip_gen: v5e
topology: v5e:2x2
jax: 0.10.0
libtpu: 0.0.40
codegen_flags: <defaults>
</compile_context>

<pallas_src>
import functools

import jax
import jax.numpy as jnp
from jax import lax
from jax.experimental import pallas as pl
from jax.experimental.pallas import tpu as pltpu


# ---------------------------------------------------------------------------
# Kernel
# ---------------------------------------------------------------------------
def _self_attention_kernel(v_ref, k_ref, q_ref, wqkv_ref, bqkv_ref, o_ref,
                           *, d_pad, mxu_dtype):
    """One grid step: TB batch elements, full sequence, full feature width."""
    tb, s, d_in = v_ref.shape

    # ---- projections -------------------------------------------------------
    # Flatten (TB, S, D_in) -> (TB*S, D_in) so each projection matmul gets
    # M = TB*S rows.  Free relayout because S % 8 == 0 (asserted in wrapper).
    # MXU operands in bf16 (or mxu_dtype), accumulation in f32.
    q2 = q_ref[...].reshape(tb * s, d_in).astype(mxu_dtype)
    k2 = k_ref[...].reshape(tb * s, d_in).astype(mxu_dtype)
    v2 = v_ref[...].reshape(tb * s, d_in).astype(mxu_dtype)

    wq = wqkv_ref[:, 0 * d_pad:1 * d_pad]
    wk = wqkv_ref[:, 1 * d_pad:2 * d_pad]
    wv = wqkv_ref[:, 2 * d_pad:3 * d_pad]
    bq = bqkv_ref[:, 0 * d_pad:1 * d_pad]
    bk = bqkv_ref[:, 1 * d_pad:2 * d_pad]
    bv = bqkv_ref[:, 2 * d_pad:3 * d_pad]

    qp = (jnp.dot(q2, wq, preferred_element_type=jnp.float32) + bq).reshape(tb, s, d_pad)
    kp = (jnp.dot(k2, wk, preferred_element_type=jnp.float32) + bk).reshape(tb, s, d_pad)
    vp = (jnp.dot(v2, wv, preferred_element_type=jnp.float32) + bv).reshape(tb, s, d_pad)

    # ---- scores = q_proj @ k_proj^T -----------------------------------------
    # The 1/sqrt(out_feat) scale is folded into wq/bq at pack time (exact for
    # power-of-two out_feat), so no extra VPU pass over the (TB,S,S) tensor.
    # Contract last axes directly (no explicit transpose); zero-padded feature
    # columns contribute exactly 0.
    scores = lax.dot_general(
        qp.astype(mxu_dtype), kp.astype(mxu_dtype),
        dimension_numbers=(((2,), (2,)), ((0,), (0,))),
        preferred_element_type=jnp.float32)                  # (TB, Lq, Lk)

    # torch.softmax(weights, dim=1): softmax over the *query* axis, in f32.
    # Exact divide (the previous approx reciprocal cost > 1e-3 relative error).
    m = jnp.max(scores, axis=1, keepdims=True)
    e = jnp.exp(scores - m)
    w = e / jnp.sum(e, axis=1, keepdims=True)

    # ---- output = weights @ value_projected ----------------------------------
    out = lax.dot_general(
        w.astype(mxu_dtype), vp.astype(mxu_dtype),
        dimension_numbers=(((2,), (1,)), ((0,), (0,))),
        preferred_element_type=jnp.float32)                  # (TB, Lq, D_pad)
    o_ref[...] = out.astype(o_ref.dtype)                     # lane-dense store


# ---------------------------------------------------------------------------
# Tiling / VMEM policy
# ---------------------------------------------------------------------------
def _vmem_capacity_bytes():
    """Physical VMEM of the current generation; conservative fallback."""
    try:
        info = pltpu.get_tpu_info()
        cap = int(getattr(info, "vmem_capacity_bytes", 0))
        if cap > 0:
            return cap
    except Exception:
        pass
    return 64 << 20   # v7x per-core VMEM: most restrictive current generation


def _per_batch_bytes(s, d_in, d_pad, mxu_itemsize):
    """Per-step VMEM bytes attributable to one batch element (incl. temporaries)."""
    b = (2 * 3 * s * d_in * 4                       # double-buffered q/k/v inputs (f32)
         + 3 * s * d_in * mxu_itemsize              # MXU-dtype copies of q/k/v rows
         + 3 * s * d_pad * 4                        # qp / kp / vp (f32)
         + 3 * s * s * 4                            # scores / exp / softmax weights
         + (3 * s * d_pad + s * s) * mxu_itemsize   # MXU-dtype copies for scores + PV
         + 3 * s * d_pad * 4)                       # out temp + double-buffered output
    return int(b * 1.25)                            # Mosaic scratch / layout headroom


def _pick_block_batch(n, s, d_in, d_pad, budget_bytes, mxu_itemsize):
    """Largest divisor of n fitting the per-step budget, preferring an even grid."""
    per_b = _per_batch_bytes(s, d_in, d_pad, mxu_itemsize)
    tb = max(1, min(n, budget_bytes // per_b))
    tb = min(tb, 128)        # bound the count of tiny 8-row score/PV MXU pushes
    while n % tb:
        tb -= 1
    # Prefer an even number of grid steps so both v7x TensorCores get work on
    # the "parallel" axis; ~0.35 us/step extra on single-TC chips (negligible).
    if n % 2 == 0:
        while (n // tb) % 2 != 0 and tb > 1:
            tb -= 1
            while n % tb:
                tb -= 1
    return tb, per_b


# ---------------------------------------------------------------------------
# One-time parameter packing (hoisted out of the forward path)
# ---------------------------------------------------------------------------
def pack_params(params, *, out_feat, mxu_dtype=jnp.bfloat16):
    """Pad projection width to a 128-lane multiple, fold 1/sqrt(out_feat) into
    the query weights/bias, and pack q/k/v weights into one (D_in, 3*D_pad)
    MXU-dtype operand plus one (1, 3*D_pad) f32 bias operand."""
    d_pad = ((out_feat + 127) // 128) * 128
    scale = 1.0 / jnp.sqrt(jnp.float32(out_feat))

    def pad_w(a):
        a = jnp.asarray(a, jnp.float32)
        return jnp.pad(a, ((0, 0), (0, d_pad - out_feat)))

    def pad_b(a):
        a = jnp.asarray(a, jnp.float32).reshape(1, -1)
        return jnp.pad(a, ((0, 0), (0, d_pad - out_feat)))

    w_qkv = jnp.concatenate(
        [pad_w(params["wq"]) * scale, pad_w(params["wk"]), pad_w(params["wv"])],
        axis=1).astype(mxu_dtype)
    b_qkv = jnp.concatenate(
        [pad_b(params["bq"]) * scale, pad_b(params["bk"]), pad_b(params["bv"])],
        axis=1)   # biases stay f32 (added after the f32-accumulated matmul)
    return {"w_qkv": w_qkv, "b_qkv": b_qkv, "out_feat": out_feat,
            "d_pad": d_pad, "mxu_dtype": mxu_dtype}


# ---------------------------------------------------------------------------
# Forward wrapper
# ---------------------------------------------------------------------------
def self_attention(value, key, query, packed, mask=None, *,
                   block_batch=None, vmem_budget_bytes=None):
    """value/key/query: (N, S, D_in) float32; packed: output of pack_params."""
    assert mask is None, "mask path of the reference module is dead code"
    # TODO(synk): `if mask:` in the PyTorch module uses an undefined self.mask.

    N, S, D_in = value.shape
    d_pad = packed["d_pad"]
    d_out = packed["out_feat"]
    w_qkv = packed["w_qkv"]
    b_qkv = packed["b_qkv"]
    mxu_dtype = packed["mxu_dtype"]

    assert S % 8 == 0, "seq_len must be a multiple of 8"
    # TODO(synk): general seq_len needs in-kernel masking of padded *query* rows
    # (softmax runs over dim=1), so plain zero-padding of S is not safe here.

    cap = _vmem_capacity_bytes()
    budget = (vmem_budget_bytes if vmem_budget_bytes is not None
              else min(cap // 3, 24 << 20))
    itemsize = jnp.dtype(mxu_dtype).itemsize
    tb_auto, per_b = _pick_block_batch(N, S, D_in, d_pad, budget, itemsize)
    tb = block_batch if block_batch is not None else tb_auto
    assert N % tb == 0, "block_batch must divide the batch size"

    # Tell the compiler what we sized for: estimated footprint (incl. the
    # resident, default-double-buffered packed weights) with 2x headroom,
    # floored at 32 MiB and capped below physical VMEM.
    weights_bytes = (w_qkv.size * w_qkv.dtype.itemsize
                     + b_qkv.size * b_qkv.dtype.itemsize)
    vmem_limit = int(min(cap * 3 // 4,
                         max(32 << 20, 2 * (per_b * tb + 2 * weights_bytes))))

    batch_spec = pl.BlockSpec((tb, S, D_in), lambda b: (b, 0, 0))
    # Weights/bias are grid-invariant (constant index_map) and stay resident.
    # TODO(synk): pl.Buffered(1) pipeline_mode would drop their redundant second
    # buffer; left at default pipelining for portability.
    w_spec = pl.BlockSpec((D_in, 3 * d_pad), lambda b: (0, 0))
    b_spec = pl.BlockSpec((1, 3 * d_pad), lambda b: (0, 0))
    out_spec = pl.BlockSpec((tb, S, d_pad), lambda b: (b, 0, 0))

    kernel = functools.partial(_self_attention_kernel,
                               d_pad=d_pad, mxu_dtype=mxu_dtype)

    out_padded = pl.pallas_call(
        kernel,
        out_shape=jax.ShapeDtypeStruct((N, S, d_pad), jnp.float32),
        grid_spec=pltpu.PrefetchScalarGridSpec(
            num_scalar_prefetch=0,
            grid=(N // tb,),
            in_specs=[batch_spec, batch_spec, batch_spec, w_spec, b_spec],
            out_specs=out_spec,
        ),
        compiler_params=pltpu.CompilerParams(
            dimension_semantics=("parallel",),
            vmem_limit_bytes=vmem_limit),
    )(value, key, query, w_qkv, b_qkv)

    # Lane-dense padded store in-kernel; strip the zero columns here.
    return out_padded[..., :d_out]


# ---------------------------------------------------------------------------
# Pure-JAX reference (mirrors the PyTorch module)
# ---------------------------------------------------------------------------
def _reference(value, key, query, params, *, out_feat,
               operand_dtype=jnp.float32):
    """operand_dtype=f32 -> exact module semantics; operand_dtype=bf16 applies
    the same MXU-operand casts as the kernel (f32 accumulate) for a tight
    structural check."""
    f32 = jnp.float32
    c = lambda a: a.astype(operand_dtype)
    ein = functools.partial(jnp.einsum, preferred_element_type=f32)
    vp = ein("bsd,de->bse", c(value), c(params["wv"])) + params["bv"]
    kp = ein("bsd,de->bse", c(key), c(params["wk"])) + params["bk"]
    qp = ein("bsd,de->bse", c(query), c(params["wq"])) + params["bq"]
    scores = ein("bqd,bkd->bqk", c(qp), c(kp)) / jnp.sqrt(f32(out_feat))
    w = jax.nn.softmax(scores, axis=1)          # dim=1, as in the torch code
    return ein("bqk,bkd->bqd", c(w), c(vp))


if __name__ == "__main__":
    # Module defaults: in_feat=512, out_feat=64; small batch / sequence.
    N, S, D_in, D_out = 2, 8, 512, 64

    root = jax.random.PRNGKey(0)
    ks = jax.random.split(root, 9)

    value = jax.random.normal(ks[0], (N, S, D_in), dtype=jnp.float32)
    key_t = jax.random.normal(ks[1], (N, S, D_in), dtype=jnp.float32)
    query = jax.random.normal(ks[2], (N, S, D_in), dtype=jnp.float32)

    bound = 1.0 / jnp.sqrt(jnp.float32(D_in))   # PyTorch Linear-style init
    params = {
        "wv": jax.random.uniform(ks[3], (D_in, D_out), jnp.float32, -bound, bound),
        "bv": jax.random.uniform(ks[4], (1, D_out), jnp.float32, -bound, bound),
        "wk": jax.random.uniform(ks[5], (D_in, D_out), jnp.float32, -bound, bound),
        "bk": jax.random.uniform(ks[6], (1, D_out), jnp.float32, -bound, bound),
        "wq": jax.random.uniform(ks[7], (D_in, D_out), jnp.float32, -bound, bound),
        "bq": jax.random.uniform(ks[8], (1, D_out), jnp.float32, -bound, bound),
    }

    packed = pack_params(params, out_feat=D_out)        # one-time, bf16 MXU path
    out = self_attention(value, key_t, query, packed)
    out = jax.block_until_ready(out)
    assert out.shape == (N, S, D_out)

    # Structural check: plain-JAX reference with the SAME MXU-operand casts must
    # match the kernel up to accumulation order (and rare bf16 rounding flips).
    ref_cast = _reference(value, key_t, query, params, out_feat=D_out,
                          operand_dtype=jnp.bfloat16)
    assert jnp.allclose(out, ref_cast, atol=5e-3, rtol=5e-3), "structural mismatch"

    # End-to-end check vs the exact f32 module semantics: tolerance sized for
    # bf16 operand rounding (~2^-9 relative per operand through three matmul
    # stages, worst case ~2e-2 absolute here); structural bugs would be O(1).
    ref_f32 = _reference(value, key_t, query, params, out_feat=D_out)
    assert jnp.allclose(out, ref_f32, atol=5e-2, rtol=5e-2), "mismatch vs f32 reference"

    print("KERNEL_OK")
</pallas_src>

<mosaic_0001>
module attributes {stable_mosaic.version = 11 : i64} {
  func.func @_self_attention_kernel(%arg0: i32, %arg1: memref<1x8x512xf32, #tpu.memory_space<vmem>>, %arg2: memref<1x8x512xf32, #tpu.memory_space<vmem>>, %arg3: memref<1x8x512xf32, #tpu.memory_space<vmem>>, %arg4: memref<512x384xbf16, #tpu.memory_space<vmem>>, %arg5: memref<1x384xf32, #tpu.memory_space<vmem>>, %arg6: memref<1x8x128xf32, #tpu.memory_space<vmem>>) attributes {dimension_semantics = [#tpu.dimension_semantics<parallel>], iteration_bounds = array<i64: 2>, scalar_prefetch = 0 : i64, scratch_operands = 0 : i64, tpu.core_type = #tpu.core_type<tc>, window_params = [{transform_indices = @transform_0, window_bounds = array<i64: 1, 8, 512>}, {transform_indices = @transform_1, window_bounds = array<i64: 1, 8, 512>}, {transform_indices = @transform_2, window_bounds = array<i64: 1, 8, 512>}, {pipeline_mode = #tpu.pipeline_mode<synchronous>, transform_indices = @transform_3, window_bounds = array<i64: 512, 384>}, {pipeline_mode = #tpu.pipeline_mode<synchronous>, transform_indices = @transform_4, window_bounds = array<i64: 1, 384>}, {transform_indices = @transform_5, window_bounds = array<i64: 1, 8, 128>}]} {
    %c0 = arith.constant 0 : index
    %c0_0 = arith.constant 0 : index
    %c0_1 = arith.constant 0 : index
    %0 = vector.load %arg3[%c0, %c0_0, %c0_1] : memref<1x8x512xf32, #tpu.memory_space<vmem>>, vector<1x8x512xf32>
    %1 = vector.shape_cast %0 : vector<1x8x512xf32> to vector<8x512xf32>
    %2 = arith.truncf %1 : vector<8x512xf32> to vector<8x512xbf16>
    %c0_2 = arith.constant 0 : index
    %c0_3 = arith.constant 0 : index
    %c0_4 = arith.constant 0 : index
    %3 = vector.load %arg2[%c0_2, %c0_3, %c0_4] : memref<1x8x512xf32, #tpu.memory_space<vmem>>, vector<1x8x512xf32>
    %4 = vector.shape_cast %3 : vector<1x8x512xf32> to vector<8x512xf32>
    %5 = arith.truncf %4 : vector<8x512xf32> to vector<8x512xbf16>
    %c0_5 = arith.constant 0 : index
    %c0_6 = arith.constant 0 : index
    %c0_7 = arith.constant 0 : index
    %6 = vector.load %arg1[%c0_5, %c0_6, %c0_7] : memref<1x8x512xf32, #tpu.memory_space<vmem>>, vector<1x8x512xf32>
    %7 = vector.shape_cast %6 : vector<1x8x512xf32> to vector<8x512xf32>
    %8 = arith.truncf %7 : vector<8x512xf32> to vector<8x512xbf16>
    %c0_8 = arith.constant 0 : index
    %c0_9 = arith.constant 0 : index
    %9 = vector.load %arg4[%c0_8, %c0_9] : memref<512x384xbf16, #tpu.memory_space<vmem>>, vector<512x128xbf16>
    %c0_10 = arith.constant 0 : index
    %c128 = arith.constant 128 : index
    %10 = vector.load %arg4[%c0_10, %c128] : memref<512x384xbf16, #tpu.memory_space<vmem>>, vector<512x128xbf16>
    %c0_11 = arith.constant 0 : index
    %c256 = arith.constant 256 : index
    %11 = vector.load %arg4[%c0_11, %c256] : memref<512x384xbf16, #tpu.memory_space<vmem>>, vector<512x128xbf16>
    %c0_12 = arith.constant 0 : index
    %c0_13 = arith.constant 0 : index
    %12 = vector.load %arg5[%c0_12, %c0_13] : memref<1x384xf32, #tpu.memory_space<vmem>>, vector<1x128xf32>
    %c0_14 = arith.constant 0 : index
    %c128_15 = arith.constant 128 : index
    %13 = vector.load %arg5[%c0_14, %c128_15] : memref<1x384xf32, #tpu.memory_space<vmem>>, vector<1x128xf32>
    %c0_16 = arith.constant 0 : index
    %c256_17 = arith.constant 256 : index
    %14 = vector.load %arg5[%c0_16, %c256_17] : memref<1x384xf32, #tpu.memory_space<vmem>>, vector<1x128xf32>
    %cst = arith.constant dense<0.000000e+00> : vector<8x128xf32>
    %15 = tpu.matmul %2, %9, %cst {dimension_numbers = #tpu.dot_dimension_numbers<[1], [0], [0], [1], [0, 0, 1, 1], [], []>} : vector<8x512xbf16>, vector<512x128xbf16>, vector<8x128xf32> -> vector<8x128xf32>
    %16 = vector.broadcast %12 : vector<1x128xf32> to vector<8x128xf32>
    %17 = arith.addf %15, %16 : vector<8x128xf32>
    %18 = vector.shape_cast %17 : vector<8x128xf32> to vector<1x8x128xf32>
    %cst_18 = arith.constant dense<0.000000e+00> : vector<8x128xf32>
    %19 = tpu.matmul %5, %10, %cst_18 {dimension_numbers = #tpu.dot_dimension_numbers<[1], [0], [0], [1], [0, 0, 1, 1], [], []>} : vector<8x512xbf16>, vector<512x128xbf16>, vector<8x128xf32> -> vector<8x128xf32>
    %20 = vector.broadcast %13 : vector<1x128xf32> to vector<8x128xf32>
    %21 = arith.addf %19, %20 : vector<8x128xf32>
    %22 = vector.shape_cast %21 : vector<8x128xf32> to vector<1x8x128xf32>
    %cst_19 = arith.constant dense<0.000000e+00> : vector<8x128xf32>
    %23 = tpu.matmul %8, %11, %cst_19 {dimension_numbers = #tpu.dot_dimension_numbers<[1], [0], [0], [1], [0, 0, 1, 1], [], []>} : vector<8x512xbf16>, vector<512x128xbf16>, vector<8x128xf32> -> vector<8x128xf32>
    %24 = vector.broadcast %14 : vector<1x128xf32> to vector<8x128xf32>
    %25 = arith.addf %23, %24 : vector<8x128xf32>
    %26 = vector.shape_cast %25 : vector<8x128xf32> to vector<1x8x128xf32>
    %27 = arith.truncf %18 : vector<1x8x128xf32> to vector<1x8x128xbf16>
    %28 = arith.truncf %22 : vector<1x8x128xf32> to vector<1x8x128xbf16>
    %cst_20 = arith.constant dense<0.000000e+00> : vector<1x8x8xf32>
    %29 = tpu.matmul %27, %28, %cst_20 {dimension_numbers = #tpu.dot_dimension_numbers<[2], [2], [1], [1], [0, 0, 0, 1, 1, 1], [0], [0]>} : vector<1x8x128xbf16>, vector<1x8x128xbf16>, vector<1x8x8xf32> -> vector<1x8x8xf32>
    %cst_21 = arith.constant dense<0xFF800000> : vector<1x8xf32>
    %30 = vector.multi_reduction <maximumf>, %29, %cst_21 [1] : vector<1x8x8xf32> to vector<1x8xf32>
    %31 = vector.shape_cast %30 : vector<1x8xf32> to vector<1x1x8xf32>
    %32 = vector.broadcast %31 : vector<1x1x8xf32> to vector<1x8x8xf32>
    %33 = arith.subf %29, %32 : vector<1x8x8xf32>
    %34 = math.exp %33 : vector<1x8x8xf32>
    %cst_22 = arith.constant dense<0.000000e+00> : vector<1x8xf32>
    %35 = vector.multi_reduction <add>, %34, %cst_22 [1] : vector<1x8x8xf32> to vector<1x8xf32>
    %36 = vector.shape_cast %35 : vector<1x8xf32> to vector<1x1x8xf32>
    %37 = vector.broadcast %36 : vector<1x1x8xf32> to vector<1x8x8xf32>
    %38 = arith.divf %34, %37 : vector<1x8x8xf32>
    %39 = arith.truncf %38 : vector<1x8x8xf32> to vector<1x8x8xbf16>
    %40 = arith.truncf %26 : vector<1x8x128xf32> to vector<1x8x128xbf16>
    %cst_23 = arith.constant dense<0.000000e+00> : vector<1x8x128xf32>
    %41 = tpu.matmul %39, %40, %cst_23 {dimension_numbers = #tpu.dot_dimension_numbers<[2], [1], [1], [2], [0, 0, 0, 1, 1, 2], [0], [0]>} : vector<1x8x8xbf16>, vector<1x8x128xbf16>, vector<1x8x128xf32> -> vector<1x8x128xf32>
    %c0_24 = arith.constant 0 : index
    %c0_25 = arith.constant 0 : index
    %c0_26 = arith.constant 0 : index
    %42 = vector.load %arg6[%c0_24, %c0_25, %c0_26] : memref<1x8x128xf32, #tpu.memory_space<vmem>>, vector<1x8x128xf32>
    tpu.vector_store %arg6[%c0_24, %c0_25, %c0_26], %41 {strides = array<i32>} : memref<1x8x128xf32, #tpu.memory_space<vmem>>, vector<1x8x128xf32>,
    return
  }
  func.func @transform_0(%arg0: i32) -> (i32, i32, i32) {
    %c0_i32 = arith.constant 0 : i32
    %c0_i32_0 = arith.constant 0 : i32
    %c0_i32_1 = arith.constant 0 : i32
    return %arg0, %c0_i32, %c0_i32_0 : i32, i32, i32
  }
  func.func @transform_1(%arg0: i32) -> (i32, i32, i32) {
    %c0_i32 = arith.constant 0 : i32
    %c0_i32_0 = arith.constant 0 : i32
    %c0_i32_1 = arith.constant 0 : i32
    return %arg0, %c0_i32, %c0_i32_0 : i32, i32, i32
  }
  func.func @transform_2(%arg0: i32) -> (i32, i32, i32) {
    %c0_i32 = arith.constant 0 : i32
    %c0_i32_0 = arith.constant 0 : i32
    %c0_i32_1 = arith.constant 0 : i32
    return %arg0, %c0_i32, %c0_i32_0 : i32, i32, i32
  }
  func.func @transform_3(%arg0: i32) -> (i32, i32) {
    %c0_i32 = arith.constant 0 : i32
    %c0_i32_0 = arith.constant 0 : i32
    %c0_i32_1 = arith.constant 0 : i32
    return %c0_i32, %c0_i32_0 : i32, i32
  }
  func.func @transform_4(%arg0: i32) -> (i32, i32) {
    %c0_i32 = arith.constant 0 : i32
    %c0_i32_0 = arith.constant 0 : i32
    %c0_i32_1 = arith.constant 0 : i32
    return %c0_i32, %c0_i32_0 : i32, i32
  }
  func.func @transform_5(%arg0: i32) -> (i32, i32, i32) {
    %c0_i32 = arith.constant 0 : i32
    %c0_i32_0 = arith.constant 0 : i32
    %c0_i32_1 = arith.constant 0 : i32
    return %arg0, %c0_i32, %c0_i32_0 : i32, i32, i32
  }
}

</mosaic_0001>

<llo_original>
// kernel: tpu_custom_call.1
$region0: #{tpu_custom_call.1}
  #allocation0 [shape = 'u32[]', space=smem, size = 0x4, offset = 0x4, fixed_abs, tag = 'smem constant byte address 0x4 - core index']
  #allocation1 [shape = 'u32[72,128]{1,0:T(1,128)}', space=vmem, size = 0x9000, scoped, tag = 'internal scratch']
  %s0 = inlined_call_operand.hbm [shape: f32[2,8,512], index: 0, kind: input, shape index: {}]
  %s1 = inlined_call_operand.hbm [shape: f32[2,8,512], index: 1, kind: input, shape index: {}]
  %s2 = inlined_call_operand.hbm [shape: f32[2,8,512], index: 2, kind: input, shape index: {}]
  %s3 = inlined_call_operand.hbm [shape: bf16[512,384], index: 3, kind: input, shape index: {}]
  %s4 = inlined_call_operand.vmem [shape: f32[1,384], index: 4, kind: input, shape index: {}]
  %s5 = inlined_call_operand.hbm [shape: f32[2,8,128], index: 5, kind: output, shape index: {}]
  %s6 = sld [smem:[#allocation0]]
  $region69: #{tpu_custom_call.1} parent=0
    _
  %s8 = ssub.s32 1, %s6
  %s9 = scalar_select 0, %s8, %s6
  $region1: #{tpu_custom_call.1} parent=0
    #allocation2 [shape = 'u8[32768]{0}', space=vmem, size = 0x8000, scoped, tag = 'input window, operand 0']
    #allocation3 [shape = 's32[2]{0}', space=sflag, size = 0x8, scoped, tag = 'scoped memory for tpu_custom_call.1']
    #allocation4 [shape = 's32[2]{0}', space=sflag, size = 0x8, scoped, tag = 'scoped memory for tpu_custom_call.1']
    #allocation5 [shape = 'u8[32768]{0}', space=vmem, size = 0x8000, scoped, tag = 'input window, operand 1']
    #allocation6 [shape = 's32[2]{0}', space=sflag, size = 0x8, scoped, tag = 'scoped memory for tpu_custom_call.1']
    #allocation7 [shape = 'u8[32768]{0}', space=vmem, size = 0x8000, scoped, tag = 'input window, operand 2']
    #allocation8 [shape = 'u8[393216]{0}', space=vmem, size = 0x60000, scoped, tag = 'input window, operand 3, single buffered']
    #allocation9 [shape = 's32[1]{0}', space=sflag, size = 0x4, scoped, tag = 'scoped memory for tpu_custom_call.1']
    #allocation10 [shape = 'u8[8192]{0}', space=vmem, size = 0x2000, scoped, tag = 'output window, operand 0']
    %10 = vsyncpa [#allocation3], 0
    %s11 = scalar_lea.sflag [#allocation3], 1
    %12 = vsyncpa %s11, 0
    %13 = vsyncpa [#allocation6], 0
    %s14 = scalar_lea.sflag [#allocation6], 1
    %15 = vsyncpa %s14, 0
    %16 = vsyncpa [#allocation9], 0
    %17 = vsyncpa [#allocation4], 0
    %s18 = scalar_lea.sflag [#allocation4], 1
    %19 = vsyncpa %s18, 0
    loop: start=0, step=1, limit=4
    $region2: #{tpu_custom_call.1} parent=1 // loop_pre_header
      _
    $region3: #{tpu_custom_call.1} parent=1 // loop_header
      %s21 = sphi 0, %s25
      %p22 = scmp.ge.s32.totalorder %s21, 4
      %s31 = sphi 0, %s33
      %s34 = sphi 0, %s31
      %s35 = sphi 0, %s34
      %s51 = sphi 0, %s35
      %s57 = sphi 0, %s59
      %s60 = sphi 0, %s57
      %s61 = sphi 0, %s60
      %s77 = sphi 0, %s61
      %s83 = sphi 0, %s85
      %s86 = sphi 0, %s83
      %s87 = sphi 0, %s86
      %s103 = sphi 0, %s87
      %s107 = sphi 0, %s107
      %s109 = sphi 0, %s107
      %s110 = sphi 0, %s109
      %s124 = sphi 0, %s110
      %s128 = sphi 0, %s128
      %s130 = sphi 0, %s128
      %s131 = sphi 0, %s130
      %s145 = sphi 0, %s131
      %s151 = sphi 0, %s153
      %s154 = sphi 0, %s151
      %s155 = sphi 0, %s154
      %s171 = sphi 0, %s155
    $region4: #{tpu_custom_call.1} parent=1 // loop_header_branch
      %24 = sbr.rel (%p22) target = $region8
    $region5: #{tpu_custom_call.1} parent=1 // loop_body
      %s26 = ssub.s32 %s21, 1
      %s27 = ssub.s32 %s21, 2
      %s28 = sadd.s32 %s21, 1
      %s29 = ssub.s32 %s21, %s28
      %p30 = scmp.eq.s32.totalorder %s29, 0
      %s32 = sadd.s32 %s31, 1
      %s33 = scalar_select %p30, %s31, %s32
      %p36 = pneg %p30
      %p37 = scmp.eq.s32.totalorder %s21, 1
      %p38 = por %p36, %p37
      %p39 = scmp.ne.s32.totalorder %s31, %s34
      %p40 = scmp.eq.s32.totalorder %s21, 0
      %p41 = por %p39, %p40
      %p42 = scmp.ne.s32.totalorder %s31, %s34
      %p43 = scmp.eq.s32.totalorder %s26, 1
      %p44 = por %p42, %p43
      %p45 = scmp.ne.s32.totalorder %s34, %s35
      %p46 = scmp.eq.s32.totalorder %s26, 0
      %p47 = por %p45, %p46
      %p48 = scmp.ne.s32.totalorder %s34, %s35
      %p49 = scmp.eq.s32.totalorder %s27, 1
      %p50 = por %p48, %p49
      %p52 = scmp.ne.s32.totalorder %s35, %s51
      %p53 = scmp.eq.s32.totalorder %s27, 0
      %p54 = por %p52, %p53
      %s55 = ssub.s32 %s21, %s28
      %p56 = scmp.eq.s32.totalorder %s55, 0
      %s58 = sadd.s32 %s57, 1
      %s59 = scalar_select %p56, %s57, %s58
      %p62 = pneg %p56
      %p63 = scmp.eq.s32.totalorder %s21, 1
      %p64 = por %p62, %p63
      %p65 = scmp.ne.s32.totalorder %s57, %s60
      %p66 = scmp.eq.s32.totalorder %s21, 0
      %p67 = por %p65, %p66
      %p68 = scmp.ne.s32.totalorder %s57, %s60
      %p69 = scmp.eq.s32.totalorder %s26, 1
      %p70 = por %p68, %p69
      %p71 = scmp.ne.s32.totalorder %s60, %s61
      %p72 = scmp.eq.s32.totalorder %s26, 0
      %p73 = por %p71, %p72
      %p74 = scmp.ne.s32.totalorder %s60, %s61
      %p75 = scmp.eq.s32.totalorder %s27, 1
      %p76 = por %p74, %p75
      %p78 = scmp.ne.s32.totalorder %s61, %s77
      %p79 = scmp.eq.s32.totalorder %s27, 0
      %p80 = por %p78, %p79
      %s81 = ssub.s32 %s21, %s28
      %p82 = scmp.eq.s32.totalorder %s81, 0
      %s84 = sadd.s32 %s83, 1
      %s85 = scalar_select %p82, %s83, %s84
      %p88 = pneg %p82
      %p89 = scmp.eq.s32.totalorder %s21, 1
      %p90 = por %p88, %p89
      %p91 = scmp.ne.s32.totalorder %s83, %s86
      %p92 = scmp.eq.s32.totalorder %s21, 0
      %p93 = por %p91, %p92
      %p94 = scmp.ne.s32.totalorder %s83, %s86
      %p95 = scmp.eq.s32.totalorder %s26, 1
      %p96 = por %p94, %p95
      %p97 = scmp.ne.s32.totalorder %s86, %s87
      %p98 = scmp.eq.s32.totalorder %s26, 0
      %p99 = por %p97, %p98
      %p100 = scmp.ne.s32.totalorder %s86, %s87
      %p101 = scmp.eq.s32.totalorder %s27, 1
      %p102 = por %p100, %p101
      %p104 = scmp.ne.s32.totalorder %s87, %s103
      %p105 = scmp.eq.s32.totalorder %s27, 0
      %p106 = por %p104, %p105
      %s108 = sadd.s32 %s107, 1
      %p111 = scmp.eq.s32.totalorder %s21, 1
      %p112 = scmp.ne.s32.totalorder %s107, %s109
      %p113 = scmp.eq.s32.totalorder %s21, 0
      %p114 = por %p112, %p113
      %p115 = scmp.ne.s32.totalorder %s107, %s109
      %p116 = scmp.eq.s32.totalorder %s26, 1
      %p117 = por %p115, %p116
      %p118 = scmp.ne.s32.totalorder %s109, %s110
      %p119 = scmp.eq.s32.totalorder %s26, 0
      %p120 = por %p118, %p119
      %p121 = scmp.ne.s32.totalorder %s109, %s110
      %p122 = scmp.eq.s32.totalorder %s27, 1
      %p123 = por %p121, %p122
      %p125 = scmp.ne.s32.totalorder %s110, %s124
      %p126 = scmp.eq.s32.totalorder %s27, 0
      %p127 = por %p125, %p126
      %s129 = sadd.s32 %s128, 1
      %p132 = scmp.eq.s32.totalorder %s21, 1
      %p133 = scmp.ne.s32.totalorder %s128, %s130
      %p134 = scmp.eq.s32.totalorder %s21, 0
      %p135 = por %p133, %p134
      %p136 = scmp.ne.s32.totalorder %s128, %s130
      %p137 = scmp.eq.s32.totalorder %s26, 1
      %p138 = por %p136, %p137
      %p139 = scmp.ne.s32.totalorder %s130, %s131
      %p140 = scmp.eq.s32.totalorder %s26, 0
      %p141 = por %p139, %p140
      %p142 = scmp.ne.s32.totalorder %s130, %s131
      %p143 = scmp.eq.s32.totalorder %s27, 1
      %p144 = por %p142, %p143
      %p146 = scmp.ne.s32.totalorder %s131, %s145
      %p147 = scmp.eq.s32.totalorder %s27, 0
      %p148 = por %p146, %p147
      %s149 = ssub.s32 %s21, %s28
      %p150 = scmp.eq.s32.totalorder %s149, 0
      %s152 = sadd.s32 %s151, 1
      %s153 = scalar_select %p150, %s151, %s152
      %p156 = pneg %p150
      %p157 = scmp.eq.s32.totalorder %s21, 1
      %p158 = por %p156, %p157
      %p159 = scmp.ne.s32.totalorder %s151, %s154
      %p160 = scmp.eq.s32.totalorder %s21, 0
      %p161 = por %p159, %p160
      %p162 = scmp.ne.s32.totalorder %s151, %s154
      %p163 = scmp.eq.s32.totalorder %s26, 1
      %p164 = por %p162, %p163
      %p165 = scmp.ne.s32.totalorder %s154, %s155
      %p166 = scmp.eq.s32.totalorder %s26, 0
      %p167 = por %p165, %p166
      %p168 = scmp.ne.s32.totalorder %s154, %s155
      %p169 = scmp.eq.s32.totalorder %s27, 1
      %p170 = por %p168, %p169
      %p172 = scmp.ne.s32.totalorder %s155, %s171
      %p173 = scmp.eq.s32.totalorder %s27, 0
      %p174 = por %p172, %p173
      %p175 = scmp.le.s32.totalorder 1, %s21
      %p176 = scmp.lt.s32.totalorder %s21, 3
      %p177 = pnand %p175, %p176
      %p178 = pneg %p177
      // Predicated region
      $region9: #{tpu_custom_call.1} parent=5 // pred_check
        _
      $region10: #{tpu_custom_call.1} parent=5 // pred_check_branch
        %180 = sbr.rel (%p177) target = $region12
      $region11: #{tpu_custom_call.1} parent=5 // pred_region
        %s181 = ssub.s32 %s21, 1
        // Predicated region
        $region13: #{tpu_custom_call.1} parent=11 // pred_check
          %p182 = pneg %p120
        $region14: #{tpu_custom_call.1} parent=11 // pred_check_branch
          %184 = sbr.rel (%p182) target = $region16
        $region15: #{tpu_custom_call.1} parent=11 // pred_region
          %186 = vsyncadd [#allocation9], 0
          %s187 = sshll.u32 %s3, 4
          %s188 = int_to_ptr.hbm [resolvable:$true] %s187
          %s189 = sshll.u32 [#allocation8], 4
          %s190 = int_to_ptr.vmem [resolvable:$true] %s189
          %195 = dma.hbm_to_vmem [thread:$0]  %s188, 12288, %s190, [#allocation9], 192, 192, 12
        $region16: #{tpu_custom_call.1} parent=11 // pred_fallthru
          _
        // Predicated region
        $region17: #{tpu_custom_call.1} parent=11 // pred_check
          %p196 = pneg %p141
        $region18: #{tpu_custom_call.1} parent=11 // pred_check_branch
          %198 = sbr.rel (%p196) target = $region20
        $region19: #{tpu_custom_call.1} parent=11 // pred_region
          _
        $region20: #{tpu_custom_call.1} parent=11 // pred_fallthru
          _
      $region12: #{tpu_custom_call.1} parent=5 // pred_fallthru
        _
      %p199 = scmp.lt.s32.totalorder %s21, 2
      // Predicated region
      $region21: #{tpu_custom_call.1} parent=5 // pred_check
        %p200 = pneg %p199
      $region22: #{tpu_custom_call.1} parent=5 // pred_check_branch
        %202 = sbr.rel (%p200) target = $region24
      $region23: #{tpu_custom_call.1} parent=5 // pred_region
        // Predicated region
        $region25: #{tpu_custom_call.1} parent=23 // pred_check
          %p203 = pneg %p41
        $region26: #{tpu_custom_call.1} parent=23 // pred_check_branch
          %205 = sbr.rel (%p203) target = $region28
        $region27: #{tpu_custom_call.1} parent=23 // pred_region
          %s206 = sand.u32 %s31, 1
          %s207 = scalar_lea.sflag [#allocation3], %s206
          %s208 = sand.u32 %s31, 1
          %s209 = smul.addr %s208, 32
          %s210 = scalar_lea.vmem [#allocation2], %s209
          %212 = vsyncadd %s207, 0
          %s213 = smul.addr %s21, 4
          %s214 = smul.addr %s213, 8
          %s215 = scalar_lea.hbm %s0, %s214
          %s217 = sshll.u32 %s215, 4
          %s218 = int_to_ptr.hbm [resolvable:$true] %s217
          %s219 = sshll.u32 %s210, 4
          %s220 = int_to_ptr.vmem [resolvable:$true] %s219
          %222 = dma.hbm_to_vmem [thread:$0]  %s218, 512, %s220, %s207
        $region28: #{tpu_custom_call.1} parent=23 // pred_fallthru
          _
        // Predicated region
        $region29: #{tpu_custom_call.1} parent=23 // pred_check
          %p223 = pneg %p67
        $region30: #{tpu_custom_call.1} parent=23 // pred_check_branch
          %225 = sbr.rel (%p223) target = $region32
        $region31: #{tpu_custom_call.1} parent=23 // pred_region
          %s226 = sand.u32 %s21, 1
          %s227 = scalar_lea.sflag [#allocation6], %s226
          %s228 = sand.u32 %s57, 1
          %s229 = smul.addr %s228, 32
          %s230 = scalar_lea.vmem [#allocation5], %s229
          %232 = vsyncadd %s227, 0
          %s233 = smul.addr %s21, 4
          %s234 = smul.addr %s233, 8
          %s235 = scalar_lea.hbm %s1, %s234
          %s237 = sshll.u32 %s235, 4
          %s238 = int_to_ptr.hbm [resolvable:$true] %s237
          %s239 = sshll.u32 %s230, 4
          %s240 = int_to_ptr.vmem [resolvable:$true] %s239
          %242 = dma.hbm_to_vmem [thread:$0]  %s238, 512, %s240, %s227
        $region32: #{tpu_custom_call.1} parent=23 // pred_fallthru
          _
        // Predicated region
        $region33: #{tpu_custom_call.1} parent=23 // pred_check
          %p243 = pneg %p93
        $region34: #{tpu_custom_call.1} parent=23 // pred_check_branch
          %245 = sbr.rel (%p243) target = $region36
        $region35: #{tpu_custom_call.1} parent=23 // pred_region
          %s246 = sand.u32 %s21, 1
          %s247 = scalar_lea.sflag [#allocation6], %s246
          %s248 = sand.u32 %s83, 1
          %s249 = smul.addr %s248, 32
          %s250 = scalar_lea.vmem [#allocation7], %s249
          %252 = vsyncadd %s247, 0
          %s253 = smul.addr %s21, 4
          %s254 = smul.addr %s253, 8
          %s255 = scalar_lea.hbm %s2, %s254
          %s257 = sshll.u32 %s255, 4
          %s258 = int_to_ptr.hbm [resolvable:$true] %s257
          %s259 = sshll.u32 %s250, 4
          %s260 = int_to_ptr.vmem [resolvable:$true] %s259
          %262 = dma.hbm_to_vmem [thread:$0]  %s258, 512, %s260, %s247
        $region36: #{tpu_custom_call.1} parent=23 // pred_fallthru
          _
      $region24: #{tpu_custom_call.1} parent=5 // pred_fallthru
        _
      %p263 = scmp.le.s32.totalorder 1, %s21
      %p264 = scmp.lt.s32.totalorder %s21, 3
      %p265 = pnand %p263, %p264
      %p266 = pneg %p265
      // Predicated region
      $region37: #{tpu_custom_call.1} parent=5 // pred_check
        _
      $region38: #{tpu_custom_call.1} parent=5 // pred_check_branch
        %268 = sbr.rel (%p265) target = $region40
      $region39: #{tpu_custom_call.1} parent=5 // pred_region
        %s269 = ssub.s32 %s21, 1
        %s270 = sand.u32 %s34, 1
        %s271 = scalar_lea.sflag [#allocation3], %s270
        %s272 = sand.u32 %s34, 1
        %s273 = smul.addr %s272, 32
        %s274 = scalar_lea.vmem [#allocation2], %s273
        // Predicated region
        $region41: #{tpu_custom_call.1} parent=39 // pred_check
          %p275 = pneg %p47
        $region42: #{tpu_custom_call.1} parent=39 // pred_check_branch
          %277 = sbr.rel (%p275) target = $region44
        $region43: #{tpu_custom_call.1} parent=39 // pred_region
          %279 = dma.done %s271, 512
        $region44: #{tpu_custom_call.1} parent=39 // pred_fallthru
          _
        %s280 = sand.u32 %s26, 1
        %s281 = scalar_lea.sflag [#allocation6], %s280
        %s282 = sand.u32 %s60, 1
        %s283 = smul.addr %s282, 32
        %s284 = scalar_lea.vmem [#allocation5], %s283
        // Predicated region
        $region45: #{tpu_custom_call.1} parent=39 // pred_check
          %p285 = pneg %p73
        $region46: #{tpu_custom_call.1} parent=39 // pred_check_branch
          %287 = sbr.rel (%p285) target = $region48
        $region47: #{tpu_custom_call.1} parent=39 // pred_region
          %289 = dma.done %s281, 512
        $region48: #{tpu_custom_call.1} parent=39 // pred_fallthru
          _
        %s290 = sand.u32 %s26, 1
        %s291 = scalar_lea.sflag [#allocation6], %s290
        %s292 = sand.u32 %s86, 1
        %s293 = smul.addr %s292, 32
        %s294 = scalar_lea.vmem [#allocation7], %s293
        // Predicated region
        $region49: #{tpu_custom_call.1} parent=39 // pred_check
          %p295 = pneg %p99
        $region50: #{tpu_custom_call.1} parent=39 // pred_check_branch
          %297 = sbr.rel (%p295) target = $region52
        $region51: #{tpu_custom_call.1} parent=39 // pred_region
          %299 = dma.done %s291, 512
        $region52: #{tpu_custom_call.1} parent=39 // pred_fallthru
          _
        // Predicated region
        $region53: #{tpu_custom_call.1} parent=39 // pred_check
          %p300 = pneg %p120
        $region54: #{tpu_custom_call.1} parent=39 // pred_check_branch
          %302 = sbr.rel (%p300) target = $region56
        $region55: #{tpu_custom_call.1} parent=39 // pred_region
          %304 = dma.done [#allocation9], 12288
        $region56: #{tpu_custom_call.1} parent=39 // pred_fallthru
          _
        %s305 = sand.u32 %s34, 1
        %s306 = scalar_lea.sflag [#allocation3], %s305
        %s307 = sand.u32 %s34, 1
        %s308 = smul.addr %s307, 32
        %s309 = scalar_lea.vmem [#allocation2], %s308
        %p310 = pneg %p47
        %p311 = pneg %p44
        %s312 = sand.u32 %s26, 1
        %s313 = scalar_lea.sflag [#allocation6], %s312
        %s314 = sand.u32 %s60, 1
        %s315 = smul.addr %s314, 32
        %s316 = scalar_lea.vmem [#allocation5], %s315
        %p317 = pneg %p73
        %p318 = pneg %p70
        %s319 = sand.u32 %s26, 1
        %s320 = scalar_lea.sflag [#allocation6], %s319
        %s321 = sand.u32 %s86, 1
        %s322 = smul.addr %s321, 32
        %s323 = scalar_lea.vmem [#allocation7], %s322
        %p324 = pneg %p99
        %p325 = pneg %p96
        %p326 = pneg %p120
        %p327 = pneg %p117
        %p328 = pneg %p141
        %p329 = pneg %p138
        %p330 = pneg %p167
        %p331 = pneg %p164
        %s332 = sand.u32 %s154, 1
        %s333 = scalar_lea.sflag [#allocation4], %s332
        %s334 = sand.u32 %s154, 1
        %s335 = smul.addr %s334, 8
        %s336 = scalar_lea.vmem [#allocation10], %s335
        %v338 = vld [vmem:[%s294] sm:$0xff]
        %v339 = vld [vmem:[%s294 + $0x8] sm:$0xff]
        %v340 = vld [vmem:[%s294 + $0x10] sm:$0xff]
        %v341 = vld [vmem:[%s294 + $0x18] sm:$0xff]
        %v342 = vpack.c.bf16 %v338, %v338
        %v343 = vpack.c.bf16 %v339, %v339
        %v344 = vpack.c.bf16 %v340, %v340
        %v345 = vpack.c.bf16 %v341, %v341
        %v346 = vld [vmem:[%s284] sm:$0xff]
        %v347 = vld [vmem:[%s284 + $0x8] sm:$0xff]
        %v348 = vld [vmem:[%s284 + $0x10] sm:$0xff]
        %v349 = vld [vmem:[%s284 + $0x18] sm:$0xff]
        %v350 = vpack.c.bf16 %v346, %v346
        %v351 = vpack.c.bf16 %v347, %v347
        %v352 = vpack.c.bf16 %v348, %v348
        %v353 = vpack.c.bf16 %v349, %v349
        %v354 = vld [vmem:[%s274] sm:$0xff]
        %v355 = vld [vmem:[%s274 + $0x8] sm:$0xff]
        %v356 = vld [vmem:[%s274 + $0x10] sm:$0xff]
        %v357 = vld [vmem:[%s274 + $0x18] sm:$0xff]
        %v358 = vpack.c.bf16 %v354, %v354
        %v359 = vpack.c.bf16 %v355, %v355
        %v360 = vpack.c.bf16 %v356, %v356
        %v361 = vpack.c.bf16 %v357, %v357
        %v362 = vld [vmem:[#allocation8] sm:$0xf]
        %v363 = vld [vmem:[#allocation8 + $0xc] sm:$0xf]
        %v364 = vld [vmem:[#allocation8 + $0x18] sm:$0xf]
        %v365 = vld [vmem:[#allocation8 + $0x24] sm:$0xf]
        %v366 = vld [vmem:[#allocation8 + $0x30] sm:$0xf]
        %v367 = vld [vmem:[#allocation8 + $0x3c] sm:$0xf]
        %v368 = vld [vmem:[#allocation8 + $0x48] sm:$0xf]
        %v369 = vld [vmem:[#allocation8 + $0x54] sm:$0xf]
        %v370 = vld [vmem:[#allocation8 + $0x60] sm:$0xf]
        %v371 = vld [vmem:[#allocation8 + $0x6c] sm:$0xf]
        %v372 = vld [vmem:[#allocation8 + $0x78] sm:$0xf]
        %v373 = vld [vmem:[#allocation8 + $0x84] sm:$0xf]
        %v374 = vld [vmem:[#allocation8 + $0x90] sm:$0xf]
        %v375 = vld [vmem:[#allocation8 + $0x9c] sm:$0xf]
        %v376 = vld [vmem:[#allocation8 + $0xa8] sm:$0xf]
        %v377 = vld [vmem:[#allocation8 + $0xb4] sm:$0xf]
        %v378 = vld [vmem:[#allocation8 + $0xc0] sm:$0xf]
        %v379 = vld [vmem:[#allocation8 + $0xcc] sm:$0xf]
        %v380 = vld [vmem:[#allocation8 + $0xd8] sm:$0xf]
        %v381 = vld [vmem:[#allocation8 + $0xe4] sm:$0xf]
        %v382 = vld [vmem:[#allocation8 + $0xf0] sm:$0xf]
        %v383 = vld [vmem:[#allocation8 + $0xfc] sm:$0xf]
        %v384 = vld [vmem:[#allocation8 + $0x108] sm:$0xf]
        %v385 = vld [vmem:[#allocation8 + $0x114] sm:$0xf]
        %v386 = vld [vmem:[#allocation8 + $0x120] sm:$0xf]
        %v387 = vld [vmem:[#allocation8 + $0x12c] sm:$0xf]
        %v388 = vld [vmem:[#allocation8 + $0x138] sm:$0xf]
        %v389 = vld [vmem:[#allocation8 + $0x144] sm:$0xf]
        %v390 = vld [vmem:[#allocation8 + $0x150] sm:$0xf]
        %v391 = vld [vmem:[#allocation8 + $0x15c] sm:$0xf]
        %v392 = vld [vmem:[#allocation8 + $0x168] sm:$0xf]
        %v393 = vld [vmem:[#allocation8 + $0x174] sm:$0xf]
        %v394 = vld [vmem:[#allocation8 + $0x180] sm:$0xf]
        %v395 = vld [vmem:[#allocation8 + $0x18c] sm:$0xf]
        %v396 = vld [vmem:[#allocation8 + $0x198] sm:$0xf]
        %v397 = vld [vmem:[#allocation8 + $0x1a4] sm:$0xf]
        %v398 = vld [vmem:[#allocation8 + $0x1b0] sm:$0xf]
        %v399 = vld [vmem:[#allocation8 + $0x1bc] sm:$0xf]
        %v400 = vld [vmem:[#allocation8 + $0x1c8] sm:$0xf]
        %v401 = vld [vmem:[#allocation8 + $0x1d4] sm:$0xf]
        %v402 = vld [vmem:[#allocation8 + $0x1e0] sm:$0xf]
        %v403 = vld [vmem:[#allocation8 + $0x1ec] sm:$0xf]
        %v404 = vld [vmem:[#allocation8 + $0x1f8] sm:$0xf]
        %v405 = vld [vmem:[#allocation8 + $0x204] sm:$0xf]
        %v406 = vld [vmem:[#allocation8 + $0x210] sm:$0xf]
        %v407 = vld [vmem:[#allocation8 + $0x21c] sm:$0xf]
        %v408 = vld [vmem:[#allocation8 + $0x228] sm:$0xf]
        %v409 = vld [vmem:[#allocation8 + $0x234] sm:$0xf]
        %v410 = vld [vmem:[#allocation8 + $0x240] sm:$0xf]
        %v411 = vld [vmem:[#allocation8 + $0x24c] sm:$0xf]
        %v412 = vld [vmem:[#allocation8 + $0x258] sm:$0xf]
        %v413 = vld [vmem:[#allocation8 + $0x264] sm:$0xf]
        %v414 = vld [vmem:[#allocation8 + $0x270] sm:$0xf]
        %v415 = vld [vmem:[#allocation8 + $0x27c] sm:$0xf]
        %v416 = vld [vmem:[#allocation8 + $0x288] sm:$0xf]
        %v417 = vld [vmem:[#allocation8 + $0x294] sm:$0xf]
        %v418 = vld [vmem:[#allocation8 + $0x2a0] sm:$0xf]
        %v419 = vld [vmem:[#allocation8 + $0x2ac] sm:$0xf]
        %v420 = vld [vmem:[#allocation8 + $0x2b8] sm:$0xf]
        %v421 = vld [vmem:[#allocation8 + $0x2c4] sm:$0xf]
        %v422 = vld [vmem:[#allocation8 + $0x2d0] sm:$0xf]
        %v423 = vld [vmem:[#allocation8 + $0x2dc] sm:$0xf]
        %v424 = vld [vmem:[#allocation8 + $0x2e8] sm:$0xf]
        %v425 = vld [vmem:[#allocation8 + $0x2f4] sm:$0xf]
        %v426 = vld [vmem:[#allocation8 + $0x4] sm:$0xf]
        %v427 = vld [vmem:[#allocation8 + $0x10] sm:$0xf]
        %v428 = vld [vmem:[#allocation8 + $0x1c] sm:$0xf]
        %v429 = vld [vmem:[#allocation8 + $0x28] sm:$0xf]
        %v430 = vld [vmem:[#allocation8 + $0x34] sm:$0xf]
        %v431 = vld [vmem:[#allocation8 + $0x40] sm:$0xf]
        %v432 = vld [vmem:[#allocation8 + $0x4c] sm:$0xf]
        %v433 = vld [vmem:[#allocation8 + $0x58] sm:$0xf]
        %v434 = vld [vmem:[#allocation8 + $0x64] sm:$0xf]
        %v435 = vld [vmem:[#allocation8 + $0x70] sm:$0xf]
        %v436 = vld [vmem:[#allocation8 + $0x7c] sm:$0xf]
        %v437 = vld [vmem:[#allocation8 + $0x88] sm:$0xf]
        %v438 = vld [vmem:[#allocation8 + $0x94] sm:$0xf]
        %v439 = vld [vmem:[#allocation8 + $0xa0] sm:$0xf]
        %v440 = vld [vmem:[#allocation8 + $0xac] sm:$0xf]
        %v441 = vld [vmem:[#allocation8 + $0xb8] sm:$0xf]
        %v442 = vld [vmem:[#allocation8 + $0xc4] sm:$0xf]
        %v443 = vld [vmem:[#allocation8 + $0xd0] sm:$0xf]
        %v444 = vld [vmem:[#allocation8 + $0xdc] sm:$0xf]
        %v445 = vld [vmem:[#allocation8 + $0xe8] sm:$0xf]
        %v446 = vld [vmem:[#allocation8 + $0xf4] sm:$0xf]
        %v447 = vld [vmem:[#allocation8 + $0x100] sm:$0xf]
        %v448 = vld [vmem:[#allocation8 + $0x10c] sm:$0xf]
        %v449 = vld [vmem:[#allocation8 + $0x118] sm:$0xf]
        %v450 = vld [vmem:[#allocation8 + $0x124] sm:$0xf]
        %v451 = vld [vmem:[#allocation8 + $0x130] sm:$0xf]
        %v452 = vld [vmem:[#allocation8 + $0x13c] sm:$0xf]
        %v453 = vld [vmem:[#allocation8 + $0x148] sm:$0xf]
        %v454 = vld [vmem:[#allocation8 + $0x154] sm:$0xf]
        %v455 = vld [vmem:[#allocation8 + $0x160] sm:$0xf]
        %v456 = vld [vmem:[#allocation8 + $0x16c] sm:$0xf]
        %v457 = vld [vmem:[#allocation8 + $0x178] sm:$0xf]
        %v458 = vld [vmem:[#allocation8 + $0x184] sm:$0xf]
        %v459 = vld [vmem:[#allocation8 + $0x190] sm:$0xf]
        %v460 = vld [vmem:[#allocation8 + $0x19c] sm:$0xf]
        %v461 = vld [vmem:[#allocation8 + $0x1a8] sm:$0xf]
        %v462 = vld [vmem:[#allocation8 + $0x1b4] sm:$0xf]
        %v463 = vld [vmem:[#allocation8 + $0x1c0] sm:$0xf]
        %v464 = vld [vmem:[#allocation8 + $0x1cc] sm:$0xf]
        %v465 = vld [vmem:[#allocation8 + $0x1d8] sm:$0xf]
        %v466 = vld [vmem:[#allocation8 + $0x1e4] sm:$0xf]
        %v467 = vld [vmem:[#allocation8 + $0x1f0] sm:$0xf]
        %v468 = vld [vmem:[#allocation8 + $0x1fc] sm:$0xf]
        %v469 = vld [vmem:[#allocation8 + $0x208] sm:$0xf]
        %v470 = vld [vmem:[#allocation8 + $0x214] sm:$0xf]
        %v471 = vld [vmem:[#allocation8 + $0x220] sm:$0xf]
        %v472 = vld [vmem:[#allocation8 + $0x22c] sm:$0xf]
        %v473 = vld [vmem:[#allocation8 + $0x238] sm:$0xf]
        %v474 = vld [vmem:[#allocation8 + $0x244] sm:$0xf]
        %v475 = vld [vmem:[#allocation8 + $0x250] sm:$0xf]
        %v476 = vld [vmem:[#allocation8 + $0x25c] sm:$0xf]
        %v477 = vld [vmem:[#allocation8 + $0x268] sm:$0xf]
        %v478 = vld [vmem:[#allocation8 + $0x274] sm:$0xf]
        %v479 = vld [vmem:[#allocation8 + $0x280] sm:$0xf]
        %v480 = vld [vmem:[#allocation8 + $0x28c] sm:$0xf]
        %v481 = vld [vmem:[#allocation8 + $0x298] sm:$0xf]
        %v482 = vld [vmem:[#allocation8 + $0x2a4] sm:$0xf]
        %v483 = vld [vmem:[#allocation8 + $0x2b0] sm:$0xf]
        %v484 = vld [vmem:[#allocation8 + $0x2bc] sm:$0xf]
        %v485 = vld [vmem:[#allocation8 + $0x2c8] sm:$0xf]
        %v486 = vld [vmem:[#allocation8 + $0x2d4] sm:$0xf]
        %v487 = vld [vmem:[#allocation8 + $0x2e0] sm:$0xf]
        %v488 = vld [vmem:[#allocation8 + $0x2ec] sm:$0xf]
        %v489 = vld [vmem:[#allocation8 + $0x2f8] sm:$0xf]
        %v490 = vld [vmem:[#allocation8 + $0x8] sm:$0xf]
        %v491 = vld [vmem:[#allocation8 + $0x14] sm:$0xf]
        %v492 = vld [vmem:[#allocation8 + $0x20] sm:$0xf]
        %v493 = vld [vmem:[#allocation8 + $0x2c] sm:$0xf]
        %v494 = vld [vmem:[#allocation8 + $0x38] sm:$0xf]
        %v495 = vld [vmem:[#allocation8 + $0x44] sm:$0xf]
        %v496 = vld [vmem:[#allocation8 + $0x50] sm:$0xf]
        %v497 = vld [vmem:[#allocation8 + $0x5c] sm:$0xf]
        %v498 = vld [vmem:[#allocation8 + $0x68] sm:$0xf]
        %v499 = vld [vmem:[#allocation8 + $0x74] sm:$0xf]
        %v500 = vld [vmem:[#allocation8 + $0x80] sm:$0xf]
        %v501 = vld [vmem:[#allocation8 + $0x8c] sm:$0xf]
        %v502 = vld [vmem:[#allocation8 + $0x98] sm:$0xf]
        %v503 = vld [vmem:[#allocation8 + $0xa4] sm:$0xf]
        %v504 = vld [vmem:[#allocation8 + $0xb0] sm:$0xf]
        %v505 = vld [vmem:[#allocation8 + $0xbc] sm:$0xf]
        %v506 = vld [vmem:[#allocation8 + $0xc8] sm:$0xf]
        %v507 = vld [vmem:[#allocation8 + $0xd4] sm:$0xf]
        %v508 = vld [vmem:[#allocation8 + $0xe0] sm:$0xf]
        %v509 = vld [vmem:[#allocation8 + $0xec] sm:$0xf]
        %v510 = vld [vmem:[#allocation8 + $0xf8] sm:$0xf]
        %v511 = vld [vmem:[#allocation8 + $0x104] sm:$0xf]
        %v512 = vld [vmem:[#allocation8 + $0x110] sm:$0xf]
        %v513 = vld [vmem:[#allocation8 + $0x11c] sm:$0xf]
        %v514 = vld [vmem:[#allocation8 + $0x128] sm:$0xf]
        %v515 = vld [vmem:[#allocation8 + $0x134] sm:$0xf]
        %v516 = vld [vmem:[#allocation8 + $0x140] sm:$0xf]
        %v517 = vld [vmem:[#allocation8 + $0x14c] sm:$0xf]
        %v518 = vld [vmem:[#allocation8 + $0x158] sm:$0xf]
        %v519 = vld [vmem:[#allocation8 + $0x164] sm:$0xf]
        %v520 = vld [vmem:[#allocation8 + $0x170] sm:$0xf]
        %v521 = vld [vmem:[#allocation8 + $0x17c] sm:$0xf]
        %v522 = vld [vmem:[#allocation8 + $0x188] sm:$0xf]
        %v523 = vld [vmem:[#allocation8 + $0x194] sm:$0xf]
        %v524 = vld [vmem:[#allocation8 + $0x1a0] sm:$0xf]
        %v525 = vld [vmem:[#allocation8 + $0x1ac] sm:$0xf]
        %v526 = vld [vmem:[#allocation8 + $0x1b8] sm:$0xf]
        %v527 = vld [vmem:[#allocation8 + $0x1c4] sm:$0xf]
        %v528 = vld [vmem:[#allocation8 + $0x1d0] sm:$0xf]
        %v529 = vld [vmem:[#allocation8 + $0x1dc] sm:$0xf]
        %v530 = vld [vmem:[#allocation8 + $0x1e8] sm:$0xf]
        %v531 = vld [vmem:[#allocation8 + $0x1f4] sm:$0xf]
        %v532 = vld [vmem:[#allocation8 + $0x200] sm:$0xf]
        %v533 = vld [vmem:[#allocation8 + $0x20c] sm:$0xf]
        %v534 = vld [vmem:[#allocation8 + $0x218] sm:$0xf]
        %v535 = vld [vmem:[#allocation8 + $0x224] sm:$0xf]
        %v536 = vld [vmem:[#allocation8 + $0x230] sm:$0xf]
        %v537 = vld [vmem:[#allocation8 + $0x23c] sm:$0xf]
        %v538 = vld [vmem:[#allocation8 + $0x248] sm:$0xf]
        %v539 = vld [vmem:[#allocation8 + $0x254] sm:$0xf]
        %v540 = vld [vmem:[#allocation8 + $0x260] sm:$0xf]
        %v541 = vld [vmem:[#allocation8 + $0x26c] sm:$0xf]
        %v542 = vld [vmem:[#allocation8 + $0x278] sm:$0xf]
        %v543 = vld [vmem:[#allocation8 + $0x284] sm:$0xf]
        %v544 = vld [vmem:[#allocation8 + $0x290] sm:$0xf]
        %v545 = vld [vmem:[#allocation8 + $0x29c] sm:$0xf]
        %v546 = vld [vmem:[#allocation8 + $0x2a8] sm:$0xf]
        %v547 = vld [vmem:[#allocation8 + $0x2b4] sm:$0xf]
        %v548 = vld [vmem:[#allocation8 + $0x2c0] sm:$0xf]
        %v549 = vld [vmem:[#allocation8 + $0x2cc] sm:$0xf]
        %v550 = vld [vmem:[#allocation8 + $0x2d8] sm:$0xf]
        %v551 = vld [vmem:[#allocation8 + $0x2e4] sm:$0xf]
        %v552 = vld [vmem:[#allocation8 + $0x2f0] sm:$0xf]
        %v553 = vld [vmem:[#allocation8 + $0x2fc] sm:$0xf]
        %v554 = vld [vmem:[%s4] sm:$0x1]
        %v555 = vld [vmem:[%s4 + $0x1] sm:$0x1]
        %v556 = vld [vmem:[%s4 + $0x2] sm:$0x1]
        %v558 = vperm.slane %v554, 0
        %v624 = vunpack.c.l.b16 %v362
        %v625 = vunpack.c.l.b16 %v363
        %v626 = vunpack.c.l.b16 %v364
        %v627 = vunpack.c.l.b16 %v365
        %v628 = vunpack.c.l.b16 %v366
        %v629 = vunpack.c.l.b16 %v367
        %v630 = vunpack.c.l.b16 %v368
        %v631 = vunpack.c.l.b16 %v369
        %v632 = vunpack.c.l.b16 %v370
        %v633 = vunpack.c.l.b16 %v371
        %v634 = vunpack.c.l.b16 %v372
        %v635 = vunpack.c.l.b16 %v373
        %v636 = vunpack.c.l.b16 %v374
        %v637 = vunpack.c.l.b16 %v375
        %v638 = vunpack.c.l.b16 %v376
        %v639 = vunpack.c.l.b16 %v377
        %v640 = vunpack.c.l.b16 %v378
        %v641 = vunpack.c.l.b16 %v379
        %v642 = vunpack.c.l.b16 %v380
        %v643 = vunpack.c.l.b16 %v381
        %v644 = vunpack.c.l.b16 %v382
        %v645 = vunpack.c.l.b16 %v383
        %v646 = vunpack.c.l.b16 %v384
        %v647 = vunpack.c.l.b16 %v385
        %v648 = vunpack.c.l.b16 %v386
        %v649 = vunpack.c.l.b16 %v387
        %v650 = vunpack.c.l.b16 %v388
        %v651 = vunpack.c.l.b16 %v389
        %v652 = vunpack.c.l.b16 %v390
        %v653 = vunpack.c.l.b16 %v391
        %v654 = vunpack.c.l.b16 %v392
        %v655 = vunpack.c.l.b16 %v393
        %v656 = vunpack.c.l.b16 %v394
        %v657 = vunpack.c.l.b16 %v395
        %v658 = vunpack.c.l.b16 %v396
        %v659 = vunpack.c.l.b16 %v397
        %v660 = vunpack.c.l.b16 %v398
        %v661 = vunpack.c.l.b16 %v399
        %v662 = vunpack.c.l.b16 %v400
        %v663 = vunpack.c.l.b16 %v401
        %v664 = vunpack.c.l.b16 %v402
        %v665 = vunpack.c.l.b16 %v403
        %v666 = vunpack.c.l.b16 %v404
        %v667 = vunpack.c.l.b16 %v405
        %v668 = vunpack.c.l.b16 %v406
        %v669 = vunpack.c.l.b16 %v407
        %v670 = vunpack.c.l.b16 %v408
        %v671 = vunpack.c.l.b16 %v409
        %v672 = vunpack.c.l.b16 %v410
        %v673 = vunpack.c.l.b16 %v411
        %v674 = vunpack.c.l.b16 %v412
        %v675 = vunpack.c.l.b16 %v413
        %v676 = vunpack.c.l.b16 %v414
        %v677 = vunpack.c.l.b16 %v415
        %v678 = vunpack.c.l.b16 %v416
        %v679 = vunpack.c.l.b16 %v417
        %v680 = vunpack.c.l.b16 %v418
        %v681 = vunpack.c.l.b16 %v419
        %v682 = vunpack.c.l.b16 %v420
        %v683 = vunpack.c.l.b16 %v421
        %v684 = vunpack.c.l.b16 %v422
        %v685 = vunpack.c.l.b16 %v423
        %v686 = vunpack.c.l.b16 %v424
        %v687 = vunpack.c.l.b16 %v425
        %v688 = vpack.c.b16 %v625, %v624
        %v689 = vpack.c.b16 %v627, %v626
        %v690 = vpack.c.b16 %v629, %v628
        %v691 = vpack.c.b16 %v631, %v630
        %v692 = vpack.c.b16 %v633, %v632
        %v693 = vpack.c.b16 %v635, %v634
        %v694 = vpack.c.b16 %v637, %v636
        %v695 = vpack.c.b16 %v639, %v638
        %v696 = vpack.c.b16 %v641, %v640
        %v697 = vpack.c.b16 %v643, %v642
        %v698 = vpack.c.b16 %v645, %v644
        %v699 = vpack.c.b16 %v647, %v646
        %v700 = vpack.c.b16 %v649, %v648
        %v701 = vpack.c.b16 %v651, %v650
        %v702 = vpack.c.b16 %v653, %v652
        %v703 = vpack.c.b16 %v655, %v654
        %v704 = vpack.c.b16 %v657, %v656
        %v705 = vpack.c.b16 %v659, %v658
        %v706 = vpack.c.b16 %v661, %v660
        %v707 = vpack.c.b16 %v663, %v662
        %v708 = vpack.c.b16 %v665, %v664
        %v709 = vpack.c.b16 %v667, %v666
        %v710 = vpack.c.b16 %v669, %v668
        %v711 = vpack.c.b16 %v671, %v670
        %v712 = vpack.c.b16 %v673, %v672
        %v713 = vpack.c.b16 %v675, %v674
        %v714 = vpack.c.b16 %v677, %v676
        %v715 = vpack.c.b16 %v679, %v678
        %v716 = vpack.c.b16 %v681, %v680
        %v717 = vpack.c.b16 %v683, %v682
        %v718 = vpack.c.b16 %v685, %v684
        %v719 = vpack.c.b16 %v687, %v686
        %752 = vmatpush.bf16.msra.mxu0 %v695
        %753 = vmatpush.bf16.msra.mxu0 %v694
        %754 = vmatpush.bf16.msra.mxu0 %v693
        %755 = vmatpush.bf16.msra.mxu0 %v692
        %756 = vmatpush.bf16.msra.mxu0 %v691
        %757 = vmatpush.bf16.msra.mxu0 %v690
        %758 = vmatpush.bf16.msra.mxu0 %v689
        %759 = vmatpush.bf16.msra.mxu0 %v688
        %760 = vmatmul.bf16.gmra.mxu0 %v342
        %v761 = vpop.f32.mrf.mxu0
        %v762 = vadd.f32 %v558, %v761
        %v763 = vpop.f32.mrf.mxu0
        %764 = vdwg.mxu0
        %765 = vmatpush.bf16.msra.mxu0 %v703
        %766 = vmatpush.bf16.msra.mxu0 %v702
        %767 = vmatpush.bf16.msra.mxu0 %v701
        %768 = vmatpush.bf16.msra.mxu0 %v700
        %769 = vmatpush.bf16.msra.mxu0 %v699
        %770 = vmatpush.bf16.msra.mxu0 %v698
        %771 = vmatpush.bf16.msra.mxu0 %v697
        %772 = vmatpush.bf16.msra.mxu0 %v696
        %773 = vmatmul.bf16.gmra.mxu0 %v343
        %v774 = vpop.f32.mrf.mxu0
        %v775 = vadd.f32 %v762, %v774
        %v776 = vpop.f32.mrf.mxu0
        %777 = vdwg.mxu0
        %778 = vmatpush.bf16.msra.mxu0 %v711
        %779 = vmatpush.bf16.msra.mxu0 %v710
        %780 = vmatpush.bf16.msra.mxu0 %v709
        %781 = vmatpush.bf16.msra.mxu0 %v708
        %782 = vmatpush.bf16.msra.mxu0 %v707
        %783 = vmatpush.bf16.msra.mxu0 %v706
        %784 = vmatpush.bf16.msra.mxu0 %v705
        %785 = vmatpush.bf16.msra.mxu0 %v704
        %786 = vmatmul.bf16.gmra.mxu0 %v344
        %v787 = vpop.f32.mrf.mxu0
        %v788 = vadd.f32 %v775, %v787
        %v789 = vpop.f32.mrf.mxu0
        %790 = vdwg.mxu0
        %791 = vmatpush.bf16.msra.mxu0 %v719
        %792 = vmatpush.bf16.msra.mxu0 %v718
        %793 = vmatpush.bf16.msra.mxu0 %v717
        %794 = vmatpush.bf16.msra.mxu0 %v716
        %795 = vmatpush.bf16.msra.mxu0 %v715
        %796 = vmatpush.bf16.msra.mxu0 %v714
        %797 = vmatpush.bf16.msra.mxu0 %v713
        %798 = vmatpush.bf16.msra.mxu0 %v712
        %799 = vmatmul.bf16.gmra.mxu0 %v345
        %v800 = vpop.f32.mrf.mxu0
        %v801 = vadd.f32 %v788, %v800
        %v802 = vpop.f32.mrf.mxu0
        %803 = vdwg.mxu0
        %v805 = vperm.slane %v555, 0
        %v871 = vunpack.c.l.b16 %v426
        %v872 = vunpack.c.l.b16 %v427
        %v873 = vunpack.c.l.b16 %v428
        %v874 = vunpack.c.l.b16 %v429
        %v875 = vunpack.c.l.b16 %v430
        %v876 = vunpack.c.l.b16 %v431
        %v877 = vunpack.c.l.b16 %v432
        %v878 = vunpack.c.l.b16 %v433
        %v879 = vunpack.c.l.b16 %v434
        %v880 = vunpack.c.l.b16 %v435
        %v881 = vunpack.c.l.b16 %v436
        %v882 = vunpack.c.l.b16 %v437
        %v883 = vunpack.c.l.b16 %v438
        %v884 = vunpack.c.l.b16 %v439
        %v885 = vunpack.c.l.b16 %v440
        %v886 = vunpack.c.l.b16 %v441
        %v887 = vunpack.c.l.b16 %v442
        %v888 = vunpack.c.l.b16 %v443
        %v889 = vunpack.c.l.b16 %v444
        %v890 = vunpack.c.l.b16 %v445
        %v891 = vunpack.c.l.b16 %v446
        %v892 = vunpack.c.l.b16 %v447
        %v893 = vunpack.c.l.b16 %v448
        %v894 = vunpack.c.l.b16 %v449
        %v895 = vunpack.c.l.b16 %v450
        %v896 = vunpack.c.l.b16 %v451
        %v897 = vunpack.c.l.b16 %v452
        %v898 = vunpack.c.l.b16 %v453
        %v899 = vunpack.c.l.b16 %v454
        %v900 = vunpack.c.l.b16 %v455
        %v901 = vunpack.c.l.b16 %v456
        %v902 = vunpack.c.l.b16 %v457
        %v903 = vunpack.c.l.b16 %v458
        %v904 = vunpack.c.l.b16 %v459
        %v905 = vunpack.c.l.b16 %v460
        %v906 = vunpack.c.l.b16 %v461
        %v907 = vunpack.c.l.b16 %v462
        %v908 = vunpack.c.l.b16 %v463
        %v909 = vunpack.c.l.b16 %v464
        %v910 = vunpack.c.l.b16 %v465
        %v911 = vunpack.c.l.b16 %v466
        %v912 = vunpack.c.l.b16 %v467
        %v913 = vunpack.c.l.b16 %v468
        %v914 = vunpack.c.l.b16 %v469
        %v915 = vunpack.c.l.b16 %v470
        %v916 = vunpack.c.l.b16 %v471
        %v917 = vunpack.c.l.b16 %v472
        %v918 = vunpack.c.l.b16 %v473
        %v919 = vunpack.c.l.b16 %v474
        %v920 = vunpack.c.l.b16 %v475
        %v921 = vunpack.c.l.b16 %v476
        %v922 = vunpack.c.l.b16 %v477
        %v923 = vunpack.c.l.b16 %v478
        %v924 = vunpack.c.l.b16 %v479
        %v925 = vunpack.c.l.b16 %v480
        %v926 = vunpack.c.l.b16 %v481
        %v927 = vunpack.c.l.b16 %v482
        %v928 = vunpack.c.l.b16 %v483
        %v929 = vunpack.c.l.b16 %v484
        %v930 = vunpack.c.l.b16 %v485
        %v931 = vunpack.c.l.b16 %v486
        %v932 = vunpack.c.l.b16 %v487
        %v933 = vunpack.c.l.b16 %v488
        %v934 = vunpack.c.l.b16 %v489
        %v935 = vpack.c.b16 %v872, %v871
        %v936 = vpack.c.b16 %v874, %v873
        %v937 = vpack.c.b16 %v876, %v875
        %v938 = vpack.c.b16 %v878, %v877
        %v939 = vpack.c.b16 %v880, %v879
        %v940 = vpack.c.b16 %v882, %v881
        %v941 = vpack.c.b16 %v884, %v883
        %v942 = vpack.c.b16 %v886, %v885
        %v943 = vpack.c.b16 %v888, %v887
        %v944 = vpack.c.b16 %v890, %v889
        %v945 = vpack.c.b16 %v892, %v891
        %v946 = vpack.c.b16 %v894, %v893
        %v947 = vpack.c.b16 %v896, %v895
        %v948 = vpack.c.b16 %v898, %v897
        %v949 = vpack.c.b16 %v900, %v899
        %v950 = vpack.c.b16 %v902, %v901
        %v951 = vpack.c.b16 %v904, %v903
        %v952 = vpack.c.b16 %v906, %v905
        %v953 = vpack.c.b16 %v908, %v907
        %v954 = vpack.c.b16 %v910, %v909
        %v955 = vpack.c.b16 %v912, %v911
        %v956 = vpack.c.b16 %v914, %v913
        %v957 = vpack.c.b16 %v916, %v915
        %v958 = vpack.c.b16 %v918, %v917
        %v959 = vpack.c.b16 %v920, %v919
        %v960 = vpack.c.b16 %v922, %v921
        %v961 = vpack.c.b16 %v924, %v923
        %v962 = vpack.c.b16 %v926, %v925
        %v963 = vpack.c.b16 %v928, %v927
        %v964 = vpack.c.b16 %v930, %v929
        %v965 = vpack.c.b16 %v932, %v931
        %v966 = vpack.c.b16 %v934, %v933
        %999 = vmatpush.bf16.msra.mxu0 %v942
        %1000 = vmatpush.bf16.msra.mxu0 %v941
        %1001 = vmatpush.bf16.msra.mxu0 %v940
        %1002 = vmatpush.bf16.msra.mxu0 %v939
        %1003 = vmatpush.bf16.msra.mxu0 %v938
        %1004 = vmatpush.bf16.msra.mxu0 %v937
        %1005 = vmatpush.bf16.msra.mxu0 %v936
        %1006 = vmatpush.bf16.msra.mxu0 %v935
        %1007 = vmatmul.bf16.gmra.mxu0 %v350
        %v1008 = vpop.f32.mrf.mxu0
        %v1009 = vadd.f32 %v805, %v1008
        %v1010 = vpop.f32.mrf.mxu0
        %1011 = vdwg.mxu0
        %1012 = vmatpush.bf16.msra.mxu0 %v950
        %1013 = vmatpush.bf16.msra.mxu0 %v949
        %1014 = vmatpush.bf16.msra.mxu0 %v948
        %1015 = vmatpush.bf16.msra.mxu0 %v947
        %1016 = vmatpush.bf16.msra.mxu0 %v946
        %1017 = vmatpush.bf16.msra.mxu0 %v945
        %1018 = vmatpush.bf16.msra.mxu0 %v944
        %1019 = vmatpush.bf16.msra.mxu0 %v943
        %1020 = vmatmul.bf16.gmra.mxu0 %v351
        %v1021 = vpop.f32.mrf.mxu0
        %v1022 = vadd.f32 %v1009, %v1021
        %v1023 = vpop.f32.mrf.mxu0
        %1024 = vdwg.mxu0
        %1025 = vmatpush.bf16.msra.mxu0 %v958
        %1026 = vmatpush.bf16.msra.mxu0 %v957
        %1027 = vmatpush.bf16.msra.mxu0 %v956
        %1028 = vmatpush.bf16.msra.mxu0 %v955
        %1029 = vmatpush.bf16.msra.mxu0 %v954
        %1030 = vmatpush.bf16.msra.mxu0 %v953
        %1031 = vmatpush.bf16.msra.mxu0 %v952
        %1032 = vmatpush.bf16.msra.mxu0 %v951
        %1033 = vmatmul.bf16.gmra.mxu0 %v352
        %v1034 = vpop.f32.mrf.mxu0
        %v1035 = vadd.f32 %v1022, %v1034
        %v1036 = vpop.f32.mrf.mxu0
        %1037 = vdwg.mxu0
        %1038 = vmatpush.bf16.msra.mxu0 %v966
        %1039 = vmatpush.bf16.msra.mxu0 %v965
        %1040 = vmatpush.bf16.msra.mxu0 %v964
        %1041 = vmatpush.bf16.msra.mxu0 %v963
        %1042 = vmatpush.bf16.msra.mxu0 %v962
        %1043 = vmatpush.bf16.msra.mxu0 %v961
        %1044 = vmatpush.bf16.msra.mxu0 %v960
        %1045 = vmatpush.bf16.msra.mxu0 %v959
        %1046 = vmatmul.bf16.gmra.mxu0 %v353
        %v1047 = vpop.f32.mrf.mxu0
        %v1048 = vadd.f32 %v1035, %v1047
        %v1049 = vpop.f32.mrf.mxu0
        %1050 = vdwg.mxu0
        %v1052 = vperm.slane %v556, 0
        %v1118 = vunpack.c.l.b16 %v490
        %v1119 = vunpack.c.l.b16 %v491
        %v1120 = vunpack.c.l.b16 %v492
        %v1121 = vunpack.c.l.b16 %v493
        %v1122 = vunpack.c.l.b16 %v494
        %v1123 = vunpack.c.l.b16 %v495
        %v1124 = vunpack.c.l.b16 %v496
        %v1125 = vunpack.c.l.b16 %v497
        %v1126 = vunpack.c.l.b16 %v498
        %v1127 = vunpack.c.l.b16 %v499
        %v1128 = vunpack.c.l.b16 %v500
        %v1129 = vunpack.c.l.b16 %v501
        %v1130 = vunpack.c.l.b16 %v502
        %v1131 = vunpack.c.l.b16 %v503
        %v1132 = vunpack.c.l.b16 %v504
        %v1133 = vunpack.c.l.b16 %v505
        %v1134 = vunpack.c.l.b16 %v506
        %v1135 = vunpack.c.l.b16 %v507
        %v1136 = vunpack.c.l.b16 %v508
        %v1137 = vunpack.c.l.b16 %v509
        %v1138 = vunpack.c.l.b16 %v510
        %v1139 = vunpack.c.l.b16 %v511
        %v1140 = vunpack.c.l.b16 %v512
        %v1141 = vunpack.c.l.b16 %v513
        %v1142 = vunpack.c.l.b16 %v514
        %v1143 = vunpack.c.l.b16 %v515
        %v1144 = vunpack.c.l.b16 %v516
        %v1145 = vunpack.c.l.b16 %v517
        %v1146 = vunpack.c.l.b16 %v518
        %v1147 = vunpack.c.l.b16 %v519
        %v1148 = vunpack.c.l.b16 %v520
        %v1149 = vunpack.c.l.b16 %v521
        %v1150 = vunpack.c.l.b16 %v522
        %v1151 = vunpack.c.l.b16 %v523
        %v1152 = vunpack.c.l.b16 %v524
        %v1153 = vunpack.c.l.b16 %v525
        %v1154 = vunpack.c.l.b16 %v526
        %v1155 = vunpack.c.l.b16 %v527
        %v1156 = vunpack.c.l.b16 %v528
        %v1157 = vunpack.c.l.b16 %v529
        %v1158 = vunpack.c.l.b16 %v530
        %v1159 = vunpack.c.l.b16 %v531
        %v1160 = vunpack.c.l.b16 %v532
        %v1161 = vunpack.c.l.b16 %v533
        %v1162 = vunpack.c.l.b16 %v534
        %v1163 = vunpack.c.l.b16 %v535
        %v1164 = vunpack.c.l.b16 %v536
        %v1165 = vunpack.c.l.b16 %v537
        %v1166 = vunpack.c.l.b16 %v538
        %v1167 = vunpack.c.l.b16 %v539
        %v1168 = vunpack.c.l.b16 %v540
        %v1169 = vunpack.c.l.b16 %v541
        %v1170 = vunpack.c.l.b16 %v542
        %v1171 = vunpack.c.l.b16 %v543
        %v1172 = vunpack.c.l.b16 %v544
        %v1173 = vunpack.c.l.b16 %v545
        %v1174 = vunpack.c.l.b16 %v546
        %v1175 = vunpack.c.l.b16 %v547
        %v1176 = vunpack.c.l.b16 %v548
        %v1177 = vunpack.c.l.b16 %v549
        %v1178 = vunpack.c.l.b16 %v550
        %v1179 = vunpack.c.l.b16 %v551
        %v1180 = vunpack.c.l.b16 %v552
        %v1181 = vunpack.c.l.b16 %v553
        %v1182 = vpack.c.b16 %v1119, %v1118
        %v1183 = vpack.c.b16 %v1121, %v1120
        %v1184 = vpack.c.b16 %v1123, %v1122
        %v1185 = vpack.c.b16 %v1125, %v1124
        %v1186 = vpack.c.b16 %v1127, %v1126
        %v1187 = vpack.c.b16 %v1129, %v1128
        %v1188 = vpack.c.b16 %v1131, %v1130
        %v1189 = vpack.c.b16 %v1133, %v1132
        %v1190 = vpack.c.b16 %v1135, %v1134
        %v1191 = vpack.c.b16 %v1137, %v1136
        %v1192 = vpack.c.b16 %v1139, %v1138
        %v1193 = vpack.c.b16 %v1141, %v1140
        %v1194 = vpack.c.b16 %v1143, %v1142
        %v1195 = vpack.c.b16 %v1145, %v1144
        %v1196 = vpack.c.b16 %v1147, %v1146
        %v1197 = vpack.c.b16 %v1149, %v1148
        %v1198 = vpack.c.b16 %v1151, %v1150
        %v1199 = vpack.c.b16 %v1153, %v1152
        %v1200 = vpack.c.b16 %v1155, %v1154
        %v1201 = vpack.c.b16 %v1157, %v1156
        %v1202 = vpack.c.b16 %v1159, %v1158
        %v1203 = vpack.c.b16 %v1161, %v1160
        %v1204 = vpack.c.b16 %v1163, %v1162
        %v1205 = vpack.c.b16 %v1165, %v1164
        %v1206 = vpack.c.b16 %v1167, %v1166
        %v1207 = vpack.c.b16 %v1169, %v1168
        %v1208 = vpack.c.b16 %v1171, %v1170
        %v1209 = vpack.c.b16 %v1173, %v1172
        %v1210 = vpack.c.b16 %v1175, %v1174
        %v1211 = vpack.c.b16 %v1177, %v1176
        %v1212 = vpack.c.b16 %v1179, %v1178
        %v1213 = vpack.c.b16 %v1181, %v1180
        %1246 = vmatpush.bf16.msra.mxu0 %v1189
        %1247 = vmatpush.bf16.msra.mxu0 %v1188
        %1248 = vmatpush.bf16.msra.mxu0 %v1187
        %1249 = vmatpush.bf16.msra.mxu0 %v1186
        %1250 = vmatpush.bf16.msra.mxu0 %v1185
        %1251 = vmatpush.bf16.msra.mxu0 %v1184
        %1252 = vmatpush.bf16.msra.mxu0 %v1183
        %1253 = vmatpush.bf16.msra.mxu0 %v1182
        %1254 = vmatmul.bf16.gmra.mxu0 %v358
        %v1255 = vpop.f32.mrf.mxu0
        %v1256 = vadd.f32 %v1052, %v1255
        %v1257 = vpop.f32.mrf.mxu0
        %1258 = vdwg.mxu0
        %1259 = vmatpush.bf16.msra.mxu0 %v1197
        %1260 = vmatpush.bf16.msra.mxu0 %v1196
        %1261 = vmatpush.bf16.msra.mxu0 %v1195
        %1262 = vmatpush.bf16.msra.mxu0 %v1194
        %1263 = vmatpush.bf16.msra.mxu0 %v1193
        %1264 = vmatpush.bf16.msra.mxu0 %v1192
        %1265 = vmatpush.bf16.msra.mxu0 %v1191
        %1266 = vmatpush.bf16.msra.mxu0 %v1190
        %1267 = vmatmul.bf16.gmra.mxu0 %v359
        %v1268 = vpop.f32.mrf.mxu0
        %v1269 = vadd.f32 %v1256, %v1268
        %v1270 = vpop.f32.mrf.mxu0
        %1271 = vdwg.mxu0
        %1272 = vmatpush.bf16.msra.mxu0 %v1205
        %1273 = vmatpush.bf16.msra.mxu0 %v1204
        %1274 = vmatpush.bf16.msra.mxu0 %v1203
        %1275 = vmatpush.bf16.msra.mxu0 %v1202
        %1276 = vmatpush.bf16.msra.mxu0 %v1201
        %1277 = vmatpush.bf16.msra.mxu0 %v1200
        %1278 = vmatpush.bf16.msra.mxu0 %v1199
        %1279 = vmatpush.bf16.msra.mxu0 %v1198
        %1280 = vmatmul.bf16.gmra.mxu0 %v360
        %v1281 = vpop.f32.mrf.mxu0
        %v1282 = vadd.f32 %v1269, %v1281
        %v1283 = vpop.f32.mrf.mxu0
        %1284 = vdwg.mxu0
        %1285 = vmatpush.bf16.msra.mxu0 %v1213
        %1286 = vmatpush.bf16.msra.mxu0 %v1212
        %1287 = vmatpush.bf16.msra.mxu0 %v1211
        %1288 = vmatpush.bf16.msra.mxu0 %v1210
        %1289 = vmatpush.bf16.msra.mxu0 %v1209
        %1290 = vmatpush.bf16.msra.mxu0 %v1208
        %1291 = vmatpush.bf16.msra.mxu0 %v1207
        %1292 = vmatpush.bf16.msra.mxu0 %v1206
        %1293 = vmatmul.bf16.gmra.mxu0 %v361
        %v1294 = vpop.f32.mrf.mxu0
        %v1295 = vadd.f32 %v1282, %v1294
        %v1296 = vpop.f32.mrf.mxu0
        %1297 = vdwg.mxu0
        %v1298 = vpack.c.bf16 %v801, %v801
        %v1299 = vpack.c.bf16 %v1048, %v1048
        %1300 = vmatpush.bf16.xpose.msra.mxu0 0
        %1301 = vmatpush.bf16.xpose.msra.mxu0 0
        %1302 = vmatpush.bf16.xpose.msra.mxu0 0
        %1303 = vmatpush.bf16.xpose.msra.mxu0 0
        %1304 = vmatpush.bf16.xpose.msra.mxu0 0
        %1305 = vmatpush.bf16.xpose.msra.mxu0 0
        %1306 = vmatpush.bf16.xpose.msra.mxu0 0
        %1307 = vmatpush.bf16.xpose.msra.mxu0 %v1299
        %1308 = vmatmul.bf16.gmra.mxu0 %v1298
        %v1309 = vpop.f32.mrf.mxu0
        %v1310 = vadd.f32 0.0, %v1309
        %v1311 = vpop.f32.mrf.mxu0
        %1312 = vdwg.mxu0
        %vm1313 = vcmask 64512
        %v1314 = vsel %vm1313, %v1310, -inf
        %v1315 = vrot.slane %v1314, 4
        %v1316 = vmax.f32 %v1314, %v1315
        %v1317 = vrot.slane %v1316, 2
        %v1318 = vmax.f32 %v1316, %v1317
        %v1319 = vrot.slane %v1318, 1
        %v1320 = vmax.f32 %v1318, %v1319
        %v1321 = vsub.f32 %v1310, %v1320
        %v1322 = vmul.f32 %v1321, 1.442695
        %v1323 = vpow.pop %v1322
        %v1324 = vsel %vm1313, %v1323, 0.0
        %v1325 = vrot.slane %v1324, 4
        %v1326 = vadd.f32 %v1324, %v1325
        %v1327 = vrot.slane %v1326, 2
        %v1328 = vadd.f32 %v1326, %v1327
        %v1329 = vrot.slane %v1328, 1
        %v1330 = vadd.f32 %v1328, %v1329
        %v1331 = vrcp.pop %v1330
        %v1332 = vmul.f32 %v1330, %v1331
        %v1333 = vsub.f32 1.0, %v1332
        %v1334 = vmul.f32 %v1331, %v1333
        %v1335 = vadd.f32 %v1331, %v1334
        %vm1336 = vweird.f32 %v1330
        %vm1337 = vweird.f32 %v1331
        %vm1338 = vmor %vm1336, %vm1337
        %v1339 = vsel %vm1338, %v1331, %v1335
        %v1340 = vand.u32 2147483647, %v1330
        %vm1341 = vcmp.eq.f32.partialorder %v1340, 8.507059e+37
        %v1342 = vand.u32 %v1330, 2147483648
        %v1343 = vor.u32 1.1754944e-38, %v1342
        %v1344 = vsel %vm1341, %v1343, %v1339
        %v1345 = vmul.f32 %v1323, %v1344
        %v1346 = vpack.c.bf16 %v1345, %v1345
        %v1347 = vpack.c.bf16 %v1295, %v1295
        %v1349 = vsel %vm1313, %v1346, 0
        %vm1351 = vcmask 1043456
        %v1353 = vsel %vm1351, %v1347, 0
        %1355 = vmatpush.bf16.msra.mxu0 0
        %1356 = vmatpush.bf16.msra.mxu0 0
        %1357 = vmatpush.bf16.msra.mxu0 0
        %1358 = vmatpush.bf16.msra.mxu0 0
        %1359 = vmatpush.bf16.msra.mxu0 0
        %1360 = vmatpush.bf16.msra.mxu0 0
        %1361 = vmatpush.bf16.msra.mxu0 0
        %1362 = vmatpush.bf16.msra.mxu0 %v1353
        %1363 = vmatmul.bf16.gmra.mxu0 %v1349
        %v1364 = vpop.f32.mrf.mxu0
        %v1365 = vadd.f32 0.0, %v1364
        %v1366 = vpop.f32.mrf.mxu0
        %1367 = vdwg.mxu0
        %1368 = vst [vmem:[%s336] sm:$0xff] %v1365
        %s1369 = sand.u32 %s154, 1
        %s1370 = scalar_lea.sflag [#allocation4], %s1369
        %s1371 = sand.u32 %s154, 1
        %s1372 = smul.addr %s1371, 8
        %s1373 = scalar_lea.vmem [#allocation10], %s1372
        // Predicated region
        $region57: #{tpu_custom_call.1} parent=39 // pred_check
          %p1374 = pneg %p164
        $region58: #{tpu_custom_call.1} parent=39 // pred_check_branch
          %1376 = sbr.rel (%p1374) target = $region60
        $region59: #{tpu_custom_call.1} parent=39 // pred_region
          %1378 = vsyncadd %s1370, 0
          %s1379 = smul.addr %s26, 8
          %s1380 = scalar_lea.hbm %s5, %s1379
          %s1382 = sshll.u32 %s1373, 4
          %s1383 = int_to_ptr.vmem [resolvable:$true] %s1382
          %s1384 = sshll.u32 %s1380, 4
          %s1385 = int_to_ptr.hbm [resolvable:$true] %s1384
          %1387 = dma.vmem_to_hbm [thread:$0]  %s1383, 128, %s1385, %s1370
        $region60: #{tpu_custom_call.1} parent=39 // pred_fallthru
          _
      $region40: #{tpu_custom_call.1} parent=5 // pred_fallthru
        _
      %p1388 = scmp.le.s32.totalorder 2, %s21
      // Predicated region
      $region61: #{tpu_custom_call.1} parent=5 // pred_check
        %p1389 = pneg %p1388
      $region62: #{tpu_custom_call.1} parent=5 // pred_check_branch
        %1391 = sbr.rel (%p1389) target = $region64
      $region63: #{tpu_custom_call.1} parent=5 // pred_region
        %s1392 = ssub.s32 %s21, 2
        // Predicated region
        $region65: #{tpu_custom_call.1} parent=63 // pred_check
          %p1393 = pneg %p170
        $region66: #{tpu_custom_call.1} parent=63 // pred_check_branch
          %1395 = sbr.rel (%p1393) target = $region68
        $region67: #{tpu_custom_call.1} parent=63 // pred_region
          %s1396 = sand.u32 %s155, 1
          %s1397 = scalar_lea.sflag [#allocation4], %s1396
          %s1398 = sand.u32 %s155, 1
          %s1399 = smul.addr %s1398, 8
          %s1400 = scalar_lea.vmem [#allocation10], %s1399
          %1402 = dma.done %s1397, 128
        $region68: #{tpu_custom_call.1} parent=63 // pred_fallthru
          _
      $region64: #{tpu_custom_call.1} parent=5 // pred_fallthru
        _
    $region6: #{tpu_custom_call.1} parent=1 // loop_footer
      %s25 = sadd.s32 1, %s21
    $region7: #{tpu_custom_call.1} parent=1 // loop_footer_branch
      %20 = sbr.rel target = $region3
    $region8: #{tpu_custom_call.1} parent=1 // loop_exit
      _
    %1403 = vsyncpa [#allocation3], 1
    %s1404 = scalar_lea.sflag [#allocation3], 1
    %1405 = vsyncpa %s1404, 1
    %1406 = vsyncpa [#allocation6], 1
    %s1407 = scalar_lea.sflag [#allocation6], 1
    %1408 = vsyncpa %s1407, 1
    %1409 = vsyncpa [#allocation9], 1
    %1410 = vsyncpa [#allocation4], 1
    %s1411 = scalar_lea.sflag [#allocation4], 1
    %1412 = vsyncpa %s1411, 1

</llo_original>
